<compile_context>
chip_gen: v5e
topology: v5e:2x2
jax: 0.10.0
libtpu: 0.0.40
codegen_flags: <defaults>
</compile_context>

<pallas_src>
import functools

import jax
import jax.numpy as jnp
from jax import lax
from jax.experimental import pallas as pl
from jax.experimental.pallas import tpu as pltpu

EPS = 1e-5


def _conv_bn_kernel(apply_relu, x_ref, w_ref, p_ref, o_ref):
    """x_ref: (K, M) transposed im2col patches; w_ref: (C_out, K); p_ref: (C_out, 3)."""
    # Whole convolution = one MXU matmul, channel-major output (lane axis = M).
    y = jnp.dot(w_ref[...], x_ref[...], preferred_element_type=jnp.float32)  # (C_out, M)

    p = p_ref[...]
    bias, gamma, beta = p[:, 0:1], p[:, 1:2], p[:, 2:3]

    y = y + bias

    # BatchNorm2d, training-mode semantics: batch mean and *biased* variance over
    # (N, H, W), which is axis 1 of the (C_out, M) layout.  M is the exact logical
    # extent, so no padding enters the statistics.
    mean = jnp.mean(y, axis=1, keepdims=True)
    var = jnp.mean(jnp.square(y - mean), axis=1, keepdims=True)
    y = (y - mean) * lax.rsqrt(var + EPS) * gamma + beta

    if apply_relu:
        y = jnp.maximum(y, 0.0)

    o_ref[...] = y.astype(o_ref.dtype)


def conv2d_batchnorm_forward(x, weight, bias, gamma, beta, *, stride=(1, 1),
                             activation="relu"):
    """x: (N, C_in, H, W) NCHW; weight: (C_out, C_in, KH, KW) (PyTorch layout)."""
    # PyTorch's Conv2d(padding='same') only allows stride 1.
    assert stride == (1, 1), "padding='same' requires stride=(1, 1)"
    n, c_in, h, w = x.shape
    c_out, _, kh, kw = weight.shape

    # 'same' padding, PyTorch rule: left/top = total//2, remainder on right/bottom.
    pad_h, pad_w = kh - 1, kw - 1
    pt, pb = pad_h // 2, pad_h - pad_h // 2
    pleft, pright = pad_w // 2, pad_w - pad_w // 2

    x_nhwc = jnp.transpose(x, (0, 2, 3, 1))
    x_pad = jnp.pad(x_nhwc, ((0, 0), (pt, pb), (pleft, pright), (0, 0)))

    # Host-side im2col, transposed: (K, M). K ordered (kh, kw, c_in), M ordered (n, h, w).
    taps = jnp.stack(
        [x_pad[:, i:i + h, j:j + w, :] for i in range(kh) for j in range(kw)],
        axis=0,
    )  # (KH*KW, N, H, W, C_in)
    patches_t = jnp.transpose(taps, (0, 4, 1, 2, 3)).reshape(kh * kw * c_in, n * h * w)

    # Weight in matching (C_out, KH*KW*C_in) layout.
    w_mat = jnp.transpose(weight, (0, 2, 3, 1)).reshape(c_out, kh * kw * c_in)

    # Pack conv bias + BN gamma + BN beta into one small tensor -> a single DMA.
    packed = jnp.stack([bias, gamma, beta], axis=1).astype(jnp.float32)  # (C_out, 3)

    k, m = patches_t.shape

    # Gridless single-block kernel: keep an eye on the VMEM footprint.
    footprint = 4 * (k * m + c_out * k + 3 * c_out + 2 * c_out * m)
    assert footprint < 24 * 1024 * 1024, "activation too large for the gridless path"
    # TODO(synk): for very large N*H*W, tile over M with a two-pass BN
    # (moment accumulation pass, then normalize pass).

    cost = pl.CostEstimate(
        flops=2 * m * k * c_out + 10 * m * c_out,
        transcendentals=c_out,
        bytes_accessed=footprint,
    )

    vmem = pl.BlockSpec(memory_space=pltpu.MemorySpace.VMEM)
    out = pl.pallas_call(
        functools.partial(_conv_bn_kernel, activation == "relu"),
        out_shape=jax.ShapeDtypeStruct((c_out, m), jnp.float32),
        in_specs=[vmem, vmem, vmem],
        out_specs=vmem,
        cost_estimate=cost,
    )(patches_t.astype(jnp.float32), w_mat.astype(jnp.float32), packed)

    # (C_out, N*H*W) -> NCHW.
    return jnp.transpose(out.reshape(c_out, n, h, w), (1, 0, 2, 3))


def _reference(x, weight, bias, gamma, beta, activation="relu"):
    """Pure-JAX reference: real conv + training-mode BatchNorm2d + ReLU."""
    kh, kw = weight.shape[2], weight.shape[3]
    pad_h, pad_w = kh - 1, kw - 1
    pads = ((pad_h // 2, pad_h - pad_h // 2), (pad_w // 2, pad_w - pad_w // 2))
    y = lax.conv_general_dilated(
        x, weight, window_strides=(1, 1), padding=pads,
        dimension_numbers=("NCHW", "OIHW", "NCHW"),
        precision=lax.Precision.HIGHEST,
    )
    y = y + bias[None, :, None, None]
    mean = jnp.mean(y, axis=(0, 2, 3), keepdims=True)
    var = jnp.mean(jnp.square(y - mean), axis=(0, 2, 3), keepdims=True)
    y = (y - mean) * lax.rsqrt(var + EPS)
    y = y * gamma[None, :, None, None] + beta[None, :, None, None]
    return jnp.maximum(y, 0.0) if activation == "relu" else y


if __name__ == "__main__":
    key = jax.random.PRNGKey(0)
    kx, kw_, kb, kg, kbe = jax.random.split(key, 5)

    N, C_IN, H, W = 2, 4, 16, 16
    C_OUT, KH, KW = 8, 3, 3

    x = jax.random.normal(kx, (N, C_IN, H, W), jnp.float32)
    weight = jax.random.normal(kw_, (C_OUT, C_IN, KH, KW), jnp.float32) * 0.1
    bias = jax.random.normal(kb, (C_OUT,), jnp.float32) * 0.1
    gamma = 1.0 + jax.random.normal(kg, (C_OUT,), jnp.float32) * 0.1
    beta = jax.random.normal(kbe, (C_OUT,), jnp.float32) * 0.1

    out = conv2d_batchnorm_forward(x, weight, bias, gamma, beta,
                                   stride=(1, 1), activation="relu")
    out = jax.block_until_ready(out)

    ref = _reference(x, weight, bias, gamma, beta, activation="relu")
    assert out.shape == (N, C_OUT, H, W)
    assert jnp.allclose(out, ref, atol=5e-3, rtol=5e-3), float(jnp.max(jnp.abs(out - ref)))

    print("KERNEL_OK")
</pallas_src>

<mosaic_0001>
module attributes {stable_mosaic.version = 11 : i64} {
  func.func @_conv_bn_kernel(%arg0: memref<36x512xf32, #tpu.memory_space<vmem>>, %arg1: memref<8x36xf32, #tpu.memory_space<vmem>>, %arg2: memref<8x3xf32, #tpu.memory_space<vmem>>, %arg3: memref<8x512xf32, #tpu.memory_space<vmem>>) attributes {dimension_semantics = [], scalar_prefetch = 0 : i64, scratch_operands = 0 : i64, tpu.core_type = #tpu.core_type<tc>} {
    %c0 = arith.constant 0 : index
    %c0_0 = arith.constant 0 : index
    %0 = vector.load %arg1[%c0, %c0_0] : memref<8x36xf32, #tpu.memory_space<vmem>>, vector<8x36xf32>
    %c0_1 = arith.constant 0 : index
    %c0_2 = arith.constant 0 : index
    %1 = vector.load %arg0[%c0_1, %c0_2] : memref<36x512xf32, #tpu.memory_space<vmem>>, vector<36x512xf32>
    %cst = arith.constant dense<0.000000e+00> : vector<8x512xf32>
    %2 = tpu.matmul %0, %1, %cst {dimension_numbers = #tpu.dot_dimension_numbers<[1], [0], [0], [1], [0, 0, 1, 1], [], []>} : vector<8x36xf32>, vector<36x512xf32>, vector<8x512xf32> -> vector<8x512xf32>
    %c0_3 = arith.constant 0 : index
    %c0_4 = arith.constant 0 : index
    %3 = vector.load %arg2[%c0_3, %c0_4] : memref<8x3xf32, #tpu.memory_space<vmem>>, vector<8x3xf32>
    %4 = vector.extract_strided_slice %3 {offsets = [0, 0], sizes = [8, 1], strides = [1, 1]} : vector<8x3xf32> to vector<8x1xf32>
    %5 = vector.extract_strided_slice %3 {offsets = [0, 1], sizes = [8, 1], strides = [1, 1]} : vector<8x3xf32> to vector<8x1xf32>
    %6 = vector.extract_strided_slice %3 {offsets = [0, 2], sizes = [8, 1], strides = [1, 1]} : vector<8x3xf32> to vector<8x1xf32>
    %7 = vector.broadcast %4 : vector<8x1xf32> to vector<8x512xf32>
    %8 = arith.addf %2, %7 : vector<8x512xf32>
    %cst_5 = arith.constant dense<0.000000e+00> : vector<8xf32>
    %9 = vector.multi_reduction <add>, %8, %cst_5 [1] : vector<8x512xf32> to vector<8xf32>
    %10 = vector.shape_cast %9 : vector<8xf32> to vector<8x1xf32>
    %cst_6 = arith.constant 5.120000e+02 : f32
    %11 = vector.broadcast %cst_6 : f32 to vector<8x1xf32>
    %12 = arith.divf %10, %11 : vector<8x1xf32>
    %13 = vector.broadcast %12 : vector<8x1xf32> to vector<8x512xf32>
    %14 = arith.subf %8, %13 : vector<8x512xf32>
    %15 = arith.mulf %14, %14 : vector<8x512xf32>
    %cst_7 = arith.constant dense<0.000000e+00> : vector<8xf32>
    %16 = vector.multi_reduction <add>, %15, %cst_7 [1] : vector<8x512xf32> to vector<8xf32>
    %17 = vector.shape_cast %16 : vector<8xf32> to vector<8x1xf32>
    %cst_8 = arith.constant 5.120000e+02 : f32
    %18 = vector.broadcast %cst_8 : f32 to vector<8x1xf32>
    %19 = arith.divf %17, %18 : vector<8x1xf32>
    %20 = vector.broadcast %12 : vector<8x1xf32> to vector<8x512xf32>
    %21 = arith.subf %8, %20 : vector<8x512xf32>
    %cst_9 = arith.constant 9.99999974E-6 : f32
    %22 = vector.broadcast %cst_9 : f32 to vector<8x1xf32>
    %23 = arith.addf %19, %22 : vector<8x1xf32>
    %24 = math.rsqrt %23 : vector<8x1xf32>
    %25 = vector.broadcast %24 : vector<8x1xf32> to vector<8x512xf32>
    %26 = arith.mulf %21, %25 : vector<8x512xf32>
    %27 = vector.broadcast %5 : vector<8x1xf32> to vector<8x512xf32>
    %28 = arith.mulf %26, %27 : vector<8x512xf32>
    %29 = vector.broadcast %6 : vector<8x1xf32> to vector<8x512xf32>
    %30 = arith.addf %28, %29 : vector<8x512xf32>
    %cst_10 = arith.constant 0.000000e+00 : f32
    %31 = vector.broadcast %cst_10 : f32 to vector<8x512xf32>
    %32 = arith.maximumf %30, %31 : vector<8x512xf32>
    %c0_11 = arith.constant 0 : index
    %c0_12 = arith.constant 0 : index
    %33 = vector.load %arg3[%c0_11, %c0_12] : memref<8x512xf32, #tpu.memory_space<vmem>>, vector<8x512xf32>
    tpu.vector_store %arg3[%c0_11, %c0_12], %32 {strides = array<i32>} : memref<8x512xf32, #tpu.memory_space<vmem>>, vector<8x512xf32>,
    return
  }
}

</mosaic_0001>

<llo_original>
// kernel: tpu_custom_call.1
$region0: #{tpu_custom_call.1}
  #allocation0 [shape = 'u32[]', space=smem, size = 0x4, offset = 0x4, fixed_abs, tag = 'smem constant byte address 0x4 - core index']
  #allocation1 [shape = 'u32[72,128]{1,0:T(1,128)}', space=vmem, size = 0x9000, scoped, tag = 'internal scratch']
  %s0 = inlined_call_operand.hbm [shape: f32[36,512], index: 0, kind: input, shape index: {}]
  %s1 = inlined_call_operand.vmem [shape: f32[8,36], index: 1, kind: input, shape index: {}]
  %s2 = inlined_call_operand.vmem [shape: f32[8,3], index: 2, kind: input, shape index: {}]
  %s3 = inlined_call_operand.hbm [shape: f32[8,512], index: 3, kind: output, shape index: {}]
  %s4 = sld [smem:[#allocation0]]
  $region26: #{tpu_custom_call.1} parent=0
    _
  %s6 = ssub.s32 1, %s4
  %s7 = scalar_select 0, %s6, %s4
  $region1: #{tpu_custom_call.1} parent=0
    #allocation2 [shape = 'u8[81920]{0}', space=vmem, size = 0x14000, scoped, tag = 'input window, operand 0, single buffered']
    #allocation3 [shape = 's32[1]{0}', space=sflag, size = 0x4, scoped, tag = 'scoped memory for tpu_custom_call.1']
    #allocation4 [shape = 's32[1]{0}', space=sflag, size = 0x4, scoped, tag = 'scoped memory for tpu_custom_call.1']
    #allocation5 [shape = 'u8[16384]{0}', space=vmem, size = 0x4000, scoped, tag = 'output window, operand 0, single buffered']
    %8 = vsyncpa [#allocation3], 0
    %9 = vsyncpa [#allocation4], 0
    // Predicated region
    $region2: #{tpu_custom_call.1} parent=1 // pred_check
      _
    $region3: #{tpu_custom_call.1} parent=1 // pred_check_branch
      %11 = sbr.rel (0) target = $region5
    $region4: #{tpu_custom_call.1} parent=1 // pred_region
      %13 = vsyncadd [#allocation3], 0
      %s14 = sshll.u32 %s0, 4
      %s15 = int_to_ptr.hbm [resolvable:$true] %s14
      %s16 = sshll.u32 [#allocation2], 4
      %s17 = int_to_ptr.vmem [resolvable:$true] %s16
      %22 = dma.hbm_to_vmem [thread:$0]  %s15, 2560, %s17, [#allocation3], 512, 512, 32
    $region5: #{tpu_custom_call.1} parent=1 // pred_fallthru
      _
    // Predicated region
    $region6: #{tpu_custom_call.1} parent=1 // pred_check
      _
    $region7: #{tpu_custom_call.1} parent=1 // pred_check_branch
      %24 = sbr.rel (0) target = $region9
    $region8: #{tpu_custom_call.1} parent=1 // pred_region
      _
    $region9: #{tpu_custom_call.1} parent=1 // pred_fallthru
      _
    // Predicated region
    $region10: #{tpu_custom_call.1} parent=1 // pred_check
      _
    $region11: #{tpu_custom_call.1} parent=1 // pred_check_branch
      %26 = sbr.rel (0) target = $region13
    $region12: #{tpu_custom_call.1} parent=1 // pred_region
      _
    $region13: #{tpu_custom_call.1} parent=1 // pred_fallthru
      _
    // Predicated region
    $region14: #{tpu_custom_call.1} parent=1 // pred_check
      _
    $region15: #{tpu_custom_call.1} parent=1 // pred_check_branch
      %28 = sbr.rel (0) target = $region17
    $region16: #{tpu_custom_call.1} parent=1 // pred_region
      %30 = dma.done [#allocation3], 2560
    $region17: #{tpu_custom_call.1} parent=1 // pred_fallthru
      _
    %v31 = vld [vmem:[%s1] sm:$0xff]
    %v32 = vld [vmem:[#allocation2] sm:$0xff]
    %v33 = vld [vmem:[#allocation2 + $0x8] sm:$0xff]
    %v34 = vld [vmem:[#allocation2 + $0x10] sm:$0xff]
    %v35 = vld [vmem:[#allocation2 + $0x18] sm:$0xff]
    %v36 = vld [vmem:[#allocation2 + $0x20] sm:$0xff]
    %v37 = vld [vmem:[#allocation2 + $0x28] sm:$0xff]
    %v38 = vld [vmem:[#allocation2 + $0x30] sm:$0xff]
    %v39 = vld [vmem:[#allocation2 + $0x38] sm:$0xff]
    %v40 = vld [vmem:[#allocation2 + $0x40] sm:$0xff]
    %v41 = vld [vmem:[#allocation2 + $0x48] sm:$0xff]
    %v42 = vld [vmem:[#allocation2 + $0x50] sm:$0xff]
    %v43 = vld [vmem:[#allocation2 + $0x58] sm:$0xff]
    %v44 = vld [vmem:[#allocation2 + $0x60] sm:$0xff]
    %v45 = vld [vmem:[#allocation2 + $0x68] sm:$0xff]
    %v46 = vld [vmem:[#allocation2 + $0x70] sm:$0xff]
    %v47 = vld [vmem:[#allocation2 + $0x78] sm:$0xff]
    %v48 = vld [vmem:[#allocation2 + $0x80] sm:$0xf]
    %v49 = vld [vmem:[#allocation2 + $0x88] sm:$0xf]
    %v50 = vld [vmem:[#allocation2 + $0x90] sm:$0xf]
    %v51 = vld [vmem:[#allocation2 + $0x98] sm:$0xf]
    %v52 = vld [vmem:[%s2] sm:$0xff]
    %54 = vset.pattern.permute.xlu0 0
    %55 = vperm.xlu0 %54, %v52
    %v56 = vpop.permute.xlu0 %55
    %vm58 = vcmask 293888
    %v60 = vsel %vm58, %v31, 0
    %vm62 = vcmask 1043456
    %v64 = vsel %vm62, %v48, 0
    %v67 = vsel %vm62, %v49, 0
    %v70 = vsel %vm62, %v50, 0
    %v73 = vsel %vm62, %v51, 0
    %75 = vmatpush.msra.mxu0 0.0
    %76 = vmatpush.msra.mxu0 0.0
    %77 = vmatpush.msra.mxu0 0.0
    %78 = vmatpush.msra.mxu0 0.0
    %79 = vmatpush.msra.mxu0 0.0
    %80 = vmatpush.msra.mxu0 0.0
    %81 = vmatpush.msra.mxu0 0.0
    %82 = vmatpush.msra.mxu0 0.0
    %83 = vmatpush.msra.mxu0 0.0
    %84 = vmatpush.msra.mxu0 0.0
    %85 = vmatpush.msra.mxu0 0.0
    %86 = vmatpush.msra.mxu0 %v64
    %87 = vmatpush.msra.mxu0 %v44
    %88 = vmatpush.msra.mxu0 %v40
    %89 = vmatpush.msra.mxu0 %v36
    %90 = vmatpush.msra.mxu0 %v32
    %91 = vmatmul.f32.gmra.mxu0 %v60
    %v92 = vpop.f32.mrf.mxu0
    %v93 = vadd.f32 %v56, %v92
    %94 = vdwg.mxu0
    %95 = vmatpush.msra.mxu0 0.0
    %96 = vmatpush.msra.mxu0 0.0
    %97 = vmatpush.msra.mxu0 0.0
    %98 = vmatpush.msra.mxu0 0.0
    %99 = vmatpush.msra.mxu0 0.0
    %100 = vmatpush.msra.mxu0 0.0
    %101 = vmatpush.msra.mxu0 0.0
    %102 = vmatpush.msra.mxu0 0.0
    %103 = vmatpush.msra.mxu0 0.0
    %104 = vmatpush.msra.mxu0 0.0
    %105 = vmatpush.msra.mxu0 0.0
    %106 = vmatpush.msra.mxu0 %v67
    %107 = vmatpush.msra.mxu0 %v45
    %108 = vmatpush.msra.mxu0 %v41
    %109 = vmatpush.msra.mxu0 %v37
    %110 = vmatpush.msra.mxu0 %v33
    %111 = vmatmul.f32.gmra.mxu0 %v60
    %v112 = vpop.f32.mrf.mxu0
    %v113 = vadd.f32 %v56, %v112
    %114 = vdwg.mxu0
    %115 = vmatpush.msra.mxu0 0.0
    %116 = vmatpush.msra.mxu0 0.0
    %117 = vmatpush.msra.mxu0 0.0
    %118 = vmatpush.msra.mxu0 0.0
    %119 = vmatpush.msra.mxu0 0.0
    %120 = vmatpush.msra.mxu0 0.0
    %121 = vmatpush.msra.mxu0 0.0
    %122 = vmatpush.msra.mxu0 0.0
    %123 = vmatpush.msra.mxu0 0.0
    %124 = vmatpush.msra.mxu0 0.0
    %125 = vmatpush.msra.mxu0 0.0
    %126 = vmatpush.msra.mxu0 %v70
    %127 = vmatpush.msra.mxu0 %v46
    %128 = vmatpush.msra.mxu0 %v42
    %129 = vmatpush.msra.mxu0 %v38
    %130 = vmatpush.msra.mxu0 %v34
    %131 = vmatmul.f32.gmra.mxu0 %v60
    %v132 = vpop.f32.mrf.mxu0
    %v133 = vadd.f32 %v56, %v132
    %134 = vdwg.mxu0
    %135 = vmatpush.msra.mxu0 0.0
    %136 = vmatpush.msra.mxu0 0.0
    %137 = vmatpush.msra.mxu0 0.0
    %138 = vmatpush.msra.mxu0 0.0
    %139 = vmatpush.msra.mxu0 0.0
    %140 = vmatpush.msra.mxu0 0.0
    %141 = vmatpush.msra.mxu0 0.0
    %142 = vmatpush.msra.mxu0 0.0
    %143 = vmatpush.msra.mxu0 0.0
    %144 = vmatpush.msra.mxu0 0.0
    %145 = vmatpush.msra.mxu0 0.0
    %146 = vmatpush.msra.mxu0 %v73
    %147 = vmatpush.msra.mxu0 %v47
    %148 = vmatpush.msra.mxu0 %v43
    %149 = vmatpush.msra.mxu0 %v39
    %150 = vmatpush.msra.mxu0 %v35
    %151 = vmatmul.f32.gmra.mxu0 %v60
    %v152 = vpop.f32.mrf.mxu0
    %v153 = vadd.f32 %v56, %v152
    %154 = vdwg.mxu0
    %v155 = vadd.f32 %v93, %v113
    %v156 = vadd.f32 %v155, %v133
    %v157 = vadd.f32 %v156, %v153
    %158 = vadd.xlane.f32.xlu0 %v157
    %v159 = vpop.xlane.xlu0 %158
    %v160 = vrcp.pop 512.0
    %v161 = vmul.f32 512.0, %v160
    %v162 = vsub.f32 1.0, %v161
    %v163 = vmul.f32 %v160, %v162
    %v164 = vadd.f32 %v160, %v163
    %vm165 = vweird.f32 %v160
    %v166 = vsel %vm165, %v160, %v164
    %v167 = vmul.f32 %v159, %v166
    %v168 = vsub.f32 %v93, %v167
    %v169 = vsub.f32 %v113, %v167
    %v170 = vsub.f32 %v133, %v167
    %v171 = vsub.f32 %v153, %v167
    %v172 = vmul.f32 %v168, %v168
    %v173 = vmul.f32 %v169, %v169
    %v174 = vmul.f32 %v170, %v170
    %v175 = vmul.f32 %v171, %v171
    %v176 = vadd.f32 %v172, %v173
    %v177 = vadd.f32 %v176, %v174
    %v178 = vadd.f32 %v177, %v175
    %179 = vadd.xlane.f32.xlu0 %v178
    %v180 = vpop.xlane.xlu0 %179
    %v181 = vmul.f32 %v180, %v166
    %v182 = vadd.f32 %v181, 1e-05
    %v183 = vrsqrt.pop %v182
    %v184 = vmul.f32 %v183, %v182
    %v185 = vmul.f32 %v184, %v183
    %v186 = vmul.f32 0.5, %v185
    %v187 = vsub.f32 1.5, %v186
    %v188 = vmul.f32 %v183, %v187
    %vm189 = vweird.f32 %v182
    %vm190 = vweird.f32 %v183
    %vm191 = vmor %vm189, %vm190
    %v192 = vsel %vm191, %v183, %v188
    %v193 = vmul.f32 %v168, %v192
    %v194 = vmul.f32 %v169, %v192
    %v195 = vmul.f32 %v170, %v192
    %v196 = vmul.f32 %v171, %v192
    %197 = vset.pattern.permute.xlu0 1
    %198 = vperm.xlu0 %197, %v52
    %v199 = vpop.permute.xlu0 %198
    %v201 = vmul.f32 %v193, %v199
    %v202 = vmul.f32 %v194, %v199
    %v203 = vmul.f32 %v195, %v199
    %v204 = vmul.f32 %v196, %v199
    %205 = vset.pattern.permute.xlu0 2
    %206 = vperm.xlu0 %205, %v52
    %v207 = vpop.permute.xlu0 %206
    %v209 = vadd.f32 %v201, %v207
    %v210 = vadd.f32 %v202, %v207
    %v211 = vadd.f32 %v203, %v207
    %v212 = vadd.f32 %v204, %v207
    %v213 = vmax.f32 %v209, 0.0
    %v214 = vmax.f32 %v210, 0.0
    %v215 = vmax.f32 %v211, 0.0
    %v216 = vmax.f32 %v212, 0.0
    %217 = vst [vmem:[#allocation5] sm:$0xff] %v213
    %218 = vst [vmem:[#allocation5 + $0x8] sm:$0xff] %v214
    %219 = vst [vmem:[#allocation5 + $0x10] sm:$0xff] %v215
    %220 = vst [vmem:[#allocation5 + $0x18] sm:$0xff] %v216
    // Predicated region
    $region18: #{tpu_custom_call.1} parent=1 // pred_check
      _
    $region19: #{tpu_custom_call.1} parent=1 // pred_check_branch
      %222 = sbr.rel (0) target = $region21
    $region20: #{tpu_custom_call.1} parent=1 // pred_region
      %224 = vsyncadd [#allocation4], 0
      %s226 = sshll.u32 [#allocation5], 4
      %s227 = int_to_ptr.vmem [resolvable:$true] %s226
      %s228 = sshll.u32 %s3, 4
      %s229 = int_to_ptr.hbm [resolvable:$true] %s228
      %231 = dma.vmem_to_hbm [thread:$0]  %s227, 512, %s229, [#allocation4]
    $region21: #{tpu_custom_call.1} parent=1 // pred_fallthru
      _
    // Predicated region
    $region22: #{tpu_custom_call.1} parent=1 // pred_check
      _
    $region23: #{tpu_custom_call.1} parent=1 // pred_check_branch
      %233 = sbr.rel (0) target = $region25
    $region24: #{tpu_custom_call.1} parent=1 // pred_region
      %235 = dma.done [#allocation4], 512
    $region25: #{tpu_custom_call.1} parent=1 // pred_fallthru
      _
    %236 = vsyncpa [#allocation3], 1
    %237 = vsyncpa [#allocation4], 1

</llo_original>
